<compile_context>
chip_gen: v5e
topology: v5e:2x2
jax: 0.10.0
libtpu: 0.0.40
codegen_flags: <defaults>
</compile_context>

<pallas_src>
import jax
import jax.numpy as jnp
from jax import lax
from jax.experimental import pallas as pl
from jax.experimental.pallas import tpu as pltpu

_UNROLL_LIMIT = 16  # full scalar unroll only for small static n


def _multi_loss_kernel(scaling_ref, losses_ref, out_ref):
    # All refs are SMEM f32: scaling_ref (n,), losses_ref (n,), out_ref (1,).
    n = scaling_ref.shape[0]
    if n <= _UNROLL_LIMIT:
        # Unrolled scalar multiply-add chain on the scalar unit.
        acc = scaling_ref[0] * losses_ref[0]
        for i in range(1, n):
            acc = acc + scaling_ref[i] * losses_ref[i]
        out_ref[0] = acc
    else:
        # Larger n: scalar-carry loop, avoids instruction bloat with zero runtime cost
        # difference (one mul+add per loss either way on the 2 sALU slots).
        def body(i, acc):
            return acc + scaling_ref[i] * losses_ref[i]

        out_ref[0] = lax.fori_loop(0, n, body, jnp.float32(0.0))


def _forward_pallas(scaling_f32: jax.Array, losses_vec_f32: jax.Array) -> jax.Array:
    n_losses = scaling_f32.shape[0]
    smem_spec = pl.BlockSpec(memory_space=pltpu.SMEM)
    out = pl.pallas_call(
        _multi_loss_kernel,
        out_shape=jax.ShapeDtypeStruct((1,), jnp.float32),
        in_specs=[smem_spec, smem_spec],
        out_specs=smem_spec,
        cost_estimate=pl.CostEstimate(
            flops=2 * n_losses,
            transcendentals=0,
            bytes_accessed=4 * (2 * n_losses + 1),
        ),
    )(scaling_f32, losses_vec_f32)
    return out[0]


@jax.custom_vjp
def vanilla_multi_loss(loss_term_scaling: jax.Array, losses: list) -> jax.Array:
    """Weighted sum of scalar losses, matching VanillaMultiLoss.forward.

    loss_term_scaling: (n_losses,) learnable parameter.
    losses: list of arrays, each squeezing to a scalar.
    Returns a scalar f32.
    """
    n_losses = loss_term_scaling.shape[0]
    if n_losses == 0 or len(losses) != n_losses:
        raise ValueError("need n_losses >= 1 and len(losses) == n_losses")

    scaling = loss_term_scaling.astype(jnp.float32)
    # Single (n_losses,) vector: one tiny 4*n-byte SMEM operand instead of N operands.
    losses_vec = jnp.stack([jnp.squeeze(l).astype(jnp.float32) for l in losses])
    return _forward_pallas(scaling, losses_vec)


def _vml_fwd(loss_term_scaling, losses):
    out = vanilla_multi_loss(loss_term_scaling, losses)
    return out, (loss_term_scaling, losses)


def _vml_bwd(residuals, g):
    loss_term_scaling, losses = residuals
    g = jnp.asarray(g, jnp.float32)
    scaling = loss_term_scaling.astype(jnp.float32)
    losses_vec = jnp.stack([jnp.squeeze(l).astype(jnp.float32) for l in losses])
    d_scaling = (g * losses_vec).astype(loss_term_scaling.dtype)
    d_losses = [
        jnp.broadcast_to(g * scaling[i], l.shape).astype(l.dtype)
        for i, l in enumerate(losses)
    ]
    return d_scaling, d_losses


vanilla_multi_loss.defvjp(_vml_fwd, _vml_bwd)


if __name__ == "__main__":
    n_losses = 4

    # Deterministic parameter init, matching nn.Parameter(torch.ones(n_losses)).
    loss_term_scaling = jnp.ones((n_losses,), dtype=jnp.float32)

    # Deterministic example "losses": each squeezes to a scalar (shape (1, 1) here).
    key = jax.random.PRNGKey(0)
    keys = jax.random.split(key, n_losses)
    losses = [jax.random.normal(k, (1, 1), dtype=jnp.float32) for k in keys]

    total = vanilla_multi_loss(loss_term_scaling, losses)
    total = jax.block_until_ready(total)

    # Pure-JAX reference check (forward).
    ref = sum(loss_term_scaling[i] * jnp.squeeze(losses[i]) for i in range(n_losses))
    assert jnp.allclose(total, ref, rtol=1e-6, atol=1e-6), (total, ref)

    # Gradient w.r.t. the learnable scaling via the pure-JAX custom_vjp.
    d_scaling = jax.grad(lambda s: vanilla_multi_loss(s, losses))(loss_term_scaling)
    d_scaling = jax.block_until_ready(d_scaling)
    ref_grad = jnp.stack([jnp.squeeze(l) for l in losses])
    assert jnp.allclose(d_scaling, ref_grad, rtol=1e-6, atol=1e-6), (d_scaling, ref_grad)

    print("KERNEL_OK")
</pallas_src>

<mosaic_0001>
module attributes {stable_mosaic.version = 11 : i64} {
  func.func @_multi_loss_kernel(%arg0: memref<4xf32, #tpu.memory_space<smem>>, %arg1: memref<4xf32, #tpu.memory_space<smem>>, %arg2: memref<1xf32, #tpu.memory_space<smem>>) attributes {dimension_semantics = [], scalar_prefetch = 0 : i64, scratch_operands = 0 : i64, tpu.core_type = #tpu.core_type<tc>} {
    %c0 = arith.constant 0 : index
    %0 = memref.load %arg0[%c0] : memref<4xf32, #tpu.memory_space<smem>>
    %c0_0 = arith.constant 0 : index
    %1 = memref.load %arg1[%c0_0] : memref<4xf32, #tpu.memory_space<smem>>
    %2 = arith.mulf %0, %1 : f32
    %c1 = arith.constant 1 : index
    %3 = memref.load %arg0[%c1] : memref<4xf32, #tpu.memory_space<smem>>
    %c1_1 = arith.constant 1 : index
    %4 = memref.load %arg1[%c1_1] : memref<4xf32, #tpu.memory_space<smem>>
    %5 = arith.mulf %3, %4 : f32
    %6 = arith.addf %2, %5 : f32
    %c2 = arith.constant 2 : index
    %7 = memref.load %arg0[%c2] : memref<4xf32, #tpu.memory_space<smem>>
    %c2_2 = arith.constant 2 : index
    %8 = memref.load %arg1[%c2_2] : memref<4xf32, #tpu.memory_space<smem>>
    %9 = arith.mulf %7, %8 : f32
    %10 = arith.addf %6, %9 : f32
    %c3 = arith.constant 3 : index
    %11 = memref.load %arg0[%c3] : memref<4xf32, #tpu.memory_space<smem>>
    %c3_3 = arith.constant 3 : index
    %12 = memref.load %arg1[%c3_3] : memref<4xf32, #tpu.memory_space<smem>>
    %13 = arith.mulf %11, %12 : f32
    %14 = arith.addf %10, %13 : f32
    %c0_4 = arith.constant 0 : index
    %15 = memref.load %arg2[%c0_4] : memref<1xf32, #tpu.memory_space<smem>>
    memref.store %14, %arg2[%c0_4] : memref<1xf32, #tpu.memory_space<smem>>
    return
  }
}

</mosaic_0001>

<llo_original>
// kernel: tpu_custom_call.1
$region0: #{tpu_custom_call.1}
  #allocation0 [shape = 'u32[]', space=smem, size = 0x4, offset = 0x4, fixed_abs, tag = 'smem constant byte address 0x4 - core index']
  #allocation1 [shape = 'u32[72,128]{1,0:T(1,128)}', space=vmem, size = 0x9000, scoped, tag = 'internal scratch']
  %s0 = inlined_call_operand.hbm [shape: f32[4], index: 0, kind: input, shape index: {}]
  %s1 = inlined_call_operand.hbm [shape: f32[4], index: 1, kind: input, shape index: {}]
  %s2 = inlined_call_operand.hbm [shape: f32[1], index: 2, kind: output, shape index: {}]
  %s3 = sld [smem:[#allocation0]]
  $region26: #{tpu_custom_call.1} parent=0
    _
  %s5 = ssub.s32 1, %s3
  %s6 = scalar_select 0, %s5, %s3
  $region1: #{tpu_custom_call.1} parent=0
    #allocation2 [shape = 'u8[512]{0}', space=smem, size = 0x200, scoped, tag = 'input window, operand 0, single buffered']
    #allocation3 [shape = 's32[1]{0}', space=sflag, size = 0x4, scoped, tag = 'scoped memory for tpu_custom_call.1']
    #allocation4 [shape = 's32[1]{0}', space=sflag, size = 0x4, scoped, tag = 'scoped memory for tpu_custom_call.1']
    #allocation5 [shape = 'u8[512]{0}', space=smem, size = 0x200, scoped, tag = 'input window, operand 1, single buffered']
    #allocation6 [shape = 's32[1]{0}', space=sflag, size = 0x4, scoped, tag = 'scoped memory for tpu_custom_call.1']
    #allocation7 [shape = 'u8[512]{0}', space=smem, size = 0x200, scoped, tag = 'output window, operand 0, single buffered']
    %7 = vsyncpa [#allocation3], 0
    %8 = vsyncpa [#allocation6], 0
    %9 = vsyncpa [#allocation4], 0
    // Predicated region
    $region2: #{tpu_custom_call.1} parent=1 // pred_check
      _
    $region3: #{tpu_custom_call.1} parent=1 // pred_check_branch
      %11 = sbr.rel (0) target = $region5
    $region4: #{tpu_custom_call.1} parent=1 // pred_region
      %13 = vsyncadd [#allocation3], 0
      %s15 = sshll.u32 %s0, 4
      %s16 = int_to_ptr.hbm [resolvable:$true] %s15
      %18 = dma.hbm_to_smem %s16, 16, [#allocation2], [#allocation3]
    $region5: #{tpu_custom_call.1} parent=1 // pred_fallthru
      _
    // Predicated region
    $region6: #{tpu_custom_call.1} parent=1 // pred_check
      _
    $region7: #{tpu_custom_call.1} parent=1 // pred_check_branch
      %20 = sbr.rel (0) target = $region9
    $region8: #{tpu_custom_call.1} parent=1 // pred_region
      %22 = vsyncadd [#allocation6], 0
      %s24 = sshll.u32 %s1, 4
      %s25 = int_to_ptr.hbm [resolvable:$true] %s24
      %27 = dma.hbm_to_smem %s25, 16, [#allocation5], [#allocation6]
    $region9: #{tpu_custom_call.1} parent=1 // pred_fallthru
      _
    // Predicated region
    $region10: #{tpu_custom_call.1} parent=1 // pred_check
      _
    $region11: #{tpu_custom_call.1} parent=1 // pred_check_branch
      %29 = sbr.rel (0) target = $region13
    $region12: #{tpu_custom_call.1} parent=1 // pred_region
      %31 = dma.done [#allocation3], 16
    $region13: #{tpu_custom_call.1} parent=1 // pred_fallthru
      _
    // Predicated region
    $region14: #{tpu_custom_call.1} parent=1 // pred_check
      _
    $region15: #{tpu_custom_call.1} parent=1 // pred_check_branch
      %33 = sbr.rel (0) target = $region17
    $region16: #{tpu_custom_call.1} parent=1 // pred_region
      %35 = dma.done [#allocation6], 16
    $region17: #{tpu_custom_call.1} parent=1 // pred_fallthru
      _
    %36 = sfence
    %s37 = sld [smem:[#allocation2]]
    %s38 = sld [smem:[#allocation5]]
    %s39 = smul.f32 %s37, %s38
    %s40 = sld [smem:[#allocation2 + $0x1]]
    %s41 = sld [smem:[#allocation5 + $0x1]]
    %s42 = smul.f32 %s40, %s41
    %s43 = sadd.f32 %s39, %s42
    %s44 = sld [smem:[#allocation2 + $0x2]]
    %s45 = sld [smem:[#allocation5 + $0x2]]
    %s46 = smul.f32 %s44, %s45
    %s47 = sadd.f32 %s43, %s46
    %s48 = sld [smem:[#allocation2 + $0x3]]
    %s49 = sld [smem:[#allocation5 + $0x3]]
    %s50 = smul.f32 %s48, %s49
    %s51 = sadd.f32 %s47, %s50
    %s52 = scalar_lea.smem [#allocation7], 0
    %53 = sst [smem:[%s52]] %s51
    // Predicated region
    $region18: #{tpu_custom_call.1} parent=1 // pred_check
      _
    $region19: #{tpu_custom_call.1} parent=1 // pred_check_branch
      %55 = sbr.rel (0) target = $region21
    $region20: #{tpu_custom_call.1} parent=1 // pred_region
      %57 = vsyncadd [#allocation4], 0
      %s59 = sshll.u32 %s2, 4
      %s60 = int_to_ptr.hbm [resolvable:$true] %s59
      %62 = dma.smem_to_hbm [#allocation7], 16, %s60, [#allocation4]
    $region21: #{tpu_custom_call.1} parent=1 // pred_fallthru
      _
    // Predicated region
    $region22: #{tpu_custom_call.1} parent=1 // pred_check
      _
    $region23: #{tpu_custom_call.1} parent=1 // pred_check_branch
      %64 = sbr.rel (0) target = $region25
    $region24: #{tpu_custom_call.1} parent=1 // pred_region
      %66 = dma.done [#allocation4], 16
    $region25: #{tpu_custom_call.1} parent=1 // pred_fallthru
      _
    %67 = sfence
    %68 = vsyncpa [#allocation3], 1
    %69 = vsyncpa [#allocation6], 1
    %70 = vsyncpa [#allocation4], 1

</llo_original>
